<compile_context>
chip_gen: v6e
topology: v6e:2x2x1
jax: 0.10.0
libtpu: 0.0.40
codegen_flags: <defaults>
</compile_context>

<pallas_src>
import functools

import jax
import jax.numpy as jnp
from jax.experimental import pallas as pl
from jax.experimental.pallas import tpu as pltpu


_LANES = 128
_TARGET_TILE_BYTES = 6 * 1024 * 1024   # per input buffer (x2 for double-buffer)


def _color_loss_kernel(x_ref, o_ref, acc_ref, *, inv_hw, tile_h, h, need_mask):
    # x_ref  : (bt, 3, tile_h, W)  spatial tile of bt batch elements
    # o_ref  : (bt, 1, 1)          per-batch-block output (resident over k)
    # acc_ref: (bt, 3, W) f32      per-channel column partial sums
    k = pl.program_id(1)

    @pl.when(k == 0)
    def _init():
        acc_ref[...] = jnp.zeros_like(acc_ref)

    # Hot path: upcast + (masked) reduce over the row axis.  Pure VPU work
    # that hides under the HBM DMA of the next tile.
    x = x_ref[...].astype(jnp.float32)                    # (bt, 3, tile_h, W)
    if need_mask:
        # Only the last k tile has rows >= H; the compare passes everything
        # on interior tiles so no extra pl.when branch is needed.
        row = k * tile_h + jax.lax.broadcasted_iota(
            jnp.int32, (1, 1, tile_h, x.shape[-1]), 2)
        x = jnp.where(row < h, x, 0.0)
    acc_ref[...] += jnp.sum(x, axis=2)                    # (bt, 3, W)

    @pl.when(k == pl.num_programs(1) - 1)
    def _finalize():
        sums = jnp.sum(acc_ref[...], axis=-1, keepdims=True)   # (bt, 3, 1)
        means = sums * inv_hw                                   # true H*W divisor
        mr = means[:, 0:1, :]
        mg = means[:, 1:2, :]
        mb = means[:, 2:3, :]
        drg = (mr - mg) ** 2
        drb = (mr - mb) ** 2
        dgb = (mb - mg) ** 2
        kval = jnp.sqrt(drg * drg + drb * drb + dgb * dgb)      # (bt, 1, 1)
        o_ref[...] = kval.astype(o_ref.dtype)


def l_color(x, *, rows_per_tile=None, batch_per_tile=None,
            target_tile_bytes=_TARGET_TILE_BYTES):
    """Pallas implementation of L_color.forward.

    Args:
      x: (B, 3, H, W) array (NCHW, same as the PyTorch module). Any float
        dtype; kept in its native dtype in HBM and upcast in-kernel.
      rows_per_tile: optional override of rows of the image per grid step
        (multiple of 8, or >= H for a single full-height tile).
      batch_per_tile: optional override of images packed per grid step.
    Returns:
      (B, 1, 1, 1) float32 array matching torch's keepdim split/pow/sqrt chain.
    """
    B, C, H, W = x.shape
    assert C == 3, "L_color expects 3 (RGB) channels"
    itemsize = jnp.dtype(x.dtype).itemsize
    hw = H * W

    # VMEM footprint of one image row inside a block (lanes pad to 128).
    lanes_w = ((W + _LANES - 1) // _LANES) * _LANES
    row_bytes = C * lanes_w * itemsize

    if rows_per_tile is None:
        tile_h = max(8, (target_tile_bytes // max(row_bytes, 1)) // 8 * 8)
    else:
        tile_h = rows_per_tile
    if tile_h >= H:
        tile_h = H                       # full extent: exempt from the /8 rule
    else:
        assert tile_h % 8 == 0, "rows_per_tile must be a multiple of 8"
    num_k = pl.cdiv(H, tile_h)

    img_bytes = row_bytes * tile_h
    if batch_per_tile is None:
        # Pack several small images per step to amortize per-step overhead.
        bt = max(1, min(B, target_tile_bytes // max(img_bytes, 1))) if num_k == 1 else 1
    else:
        bt = min(batch_per_tile, B)
    num_b = pl.cdiv(B, bt)   # partial last batch block: OOB reads are masked-
                             # by-construction (their outputs are dropped).

    need_mask = (H % tile_h) != 0
    inv_hw = 1.0 / float(hw)

    kernel = functools.partial(
        _color_loss_kernel, inv_hw=inv_hw, tile_h=tile_h, h=H,
        need_mask=need_mask)

    out = pl.pallas_call(
        kernel,
        out_shape=jax.ShapeDtypeStruct((B, 1, 1), jnp.float32),
        grid=(num_b, num_k),
        in_specs=[
            pl.BlockSpec((bt, C, tile_h, W), lambda b, k: (b, 0, k, 0)),
        ],
        out_specs=pl.BlockSpec((bt, 1, 1), lambda b, k: (b, 0, 0)),
        scratch_shapes=[pltpu.VMEM((bt, C, W), jnp.float32)],
        compiler_params=pltpu.CompilerParams(
            dimension_semantics=("parallel", "arbitrary"),
            vmem_limit_bytes=32 * 1024 * 1024),
        cost_estimate=pl.CostEstimate(
            flops=B * C * hw,
            transcendentals=B,
            bytes_accessed=B * C * hw * itemsize + B * 4),
    )(x)

    return out.reshape(B, 1, 1, 1)


def _l_color_ref(x):
    # Plain-JAX reference mirroring the torch code.
    mean_rgb = jnp.mean(x, axis=(2, 3), keepdims=True)         # (B, 3, 1, 1)
    mr = mean_rgb[:, 0:1]
    mg = mean_rgb[:, 1:2]
    mb = mean_rgb[:, 2:3]
    drg = (mr - mg) ** 2
    drb = (mr - mb) ** 2
    dgb = (mb - mg) ** 2
    return jnp.sqrt(drg ** 2 + drb ** 2 + dgb ** 2)             # (B, 1, 1, 1)


if __name__ == "__main__":
    key = jax.random.PRNGKey(0)
    k1, k2, k3, k4 = jax.random.split(key, 4)

    # 1) Small aligned shape; batch-blocked single-tile path (bt=2, num_k=1).
    x1 = jax.random.uniform(k1, (2, 3, 16, 16), dtype=jnp.float32)
    out1 = jax.block_until_ready(l_color(x1))
    ref1 = _l_color_ref(x1)
    assert out1.shape == (2, 1, 1, 1), out1.shape
    assert jnp.allclose(out1, ref1, atol=1e-6, rtol=1e-4), (out1, ref1)

    # 2) Multi-spatial-tile accumulation path (tile_h=8 -> 8 k-steps/image).
    x2 = jax.random.uniform(k2, (2, 3, 64, 64), dtype=jnp.float32)
    out2 = jax.block_until_ready(l_color(x2, rows_per_tile=8))
    ref2 = _l_color_ref(x2)
    assert jnp.allclose(out2, ref2, atol=1e-6, rtol=1e-4), (out2, ref2)

    # 3) Ragged H tail (19 % 8 != 0) and narrow W: in-kernel masking, no pad.
    x3 = jax.random.uniform(k3, (3, 3, 19, 7), dtype=jnp.float32)
    out3 = jax.block_until_ready(l_color(x3, rows_per_tile=8))
    ref3 = _l_color_ref(x3)
    assert jnp.allclose(out3, ref3, atol=1e-6, rtol=1e-4), (out3, ref3)

    # 4) Narrow dtype kept in HBM + batch block that does not divide B
    #    (out-of-bounds batch slots compute garbage whose writes are dropped).
    x4 = jax.random.uniform(k4, (3, 3, 16, 16), dtype=jnp.float32).astype(jnp.bfloat16)
    out4 = jax.block_until_ready(l_color(x4, batch_per_tile=2))
    ref4 = _l_color_ref(x4.astype(jnp.float32))
    assert jnp.allclose(out4, ref4, atol=1e-5, rtol=1e-3), (out4, ref4)

    print("KERNEL_OK")
</pallas_src>

<mosaic_0001>
module attributes {stable_mosaic.version = 11 : i64} {
  func.func @_color_loss_kernel(%arg0: i32, %arg1: i32, %arg2: memref<2x3x16x16xf32, #tpu.memory_space<vmem>>, %arg3: memref<2x1x1xf32, #tpu.memory_space<vmem>>, %arg4: memref<2x3x16xf32, #tpu.memory_space<vmem>>) attributes {dimension_semantics = [#tpu.dimension_semantics<parallel>, #tpu.dimension_semantics<arbitrary>], iteration_bounds = array<i64: 1, 1>, scalar_prefetch = 0 : i64, scratch_operands = 1 : i64, tpu.core_type = #tpu.core_type<tc>, window_params = [{transform_indices = @transform_0, window_bounds = array<i64: 2, 3, 16, 16>}, {transform_indices = @transform_1, window_bounds = array<i64: 2, 1, 1>}]} {
    %c0_i32 = arith.constant 0 : i32
    %0 = arith.cmpi eq, %arg1, %c0_i32 : i32
    %1 = arith.extui %0 : i1 to i32
    %c0_i32_0 = arith.constant 0 : i32
    %2 = arith.cmpi ne, %1, %c0_i32_0 : i32
    scf.if %2 {
      %cst_12 = arith.constant 0.000000e+00 : f32
      %11 = vector.broadcast %cst_12 : f32 to vector<2x3x16xf32>
      %c0_13 = arith.constant 0 : index
      %c0_14 = arith.constant 0 : index
      %c0_15 = arith.constant 0 : index
      %12 = vector.load %arg4[%c0_13, %c0_14, %c0_15] : memref<2x3x16xf32, #tpu.memory_space<vmem>>, vector<2x3x16xf32>
      tpu.vector_store %arg4[%c0_13, %c0_14, %c0_15], %11 {strides = array<i32>} : memref<2x3x16xf32, #tpu.memory_space<vmem>>, vector<2x3x16xf32>,
    } else {
    }
    %c0 = arith.constant 0 : index
    %c0_1 = arith.constant 0 : index
    %c0_2 = arith.constant 0 : index
    %c0_3 = arith.constant 0 : index
    %3 = vector.load %arg2[%c0, %c0_1, %c0_2, %c0_3] : memref<2x3x16x16xf32, #tpu.memory_space<vmem>>, vector<2x3x16x16xf32>
    %c0_4 = arith.constant 0 : index
    %c0_5 = arith.constant 0 : index
    %c0_6 = arith.constant 0 : index
    %4 = vector.load %arg4[%c0_4, %c0_5, %c0_6] : memref<2x3x16xf32, #tpu.memory_space<vmem>>, vector<2x3x16xf32>
    %cst = arith.constant dense<0.000000e+00> : vector<2x3x16xf32>
    %5 = vector.multi_reduction <add>, %3, %cst [2] : vector<2x3x16x16xf32> to vector<2x3x16xf32>
    %6 = arith.addf %4, %5 : vector<2x3x16xf32>
    %c0_7 = arith.constant 0 : index
    %c0_8 = arith.constant 0 : index
    %c0_9 = arith.constant 0 : index
    %7 = vector.load %arg4[%c0_7, %c0_8, %c0_9] : memref<2x3x16xf32, #tpu.memory_space<vmem>>, vector<2x3x16xf32>
    tpu.vector_store %arg4[%c0_7, %c0_8, %c0_9], %6 {strides = array<i32>} : memref<2x3x16xf32, #tpu.memory_space<vmem>>, vector<2x3x16xf32>,
    %c0_i32_10 = arith.constant 0 : i32
    %8 = arith.cmpi eq, %arg1, %c0_i32_10 : i32
    %9 = arith.extui %8 : i1 to i32
    %c0_i32_11 = arith.constant 0 : i32
    %10 = arith.cmpi ne, %9, %c0_i32_11 : i32
    scf.if %10 {
      %c0_12 = arith.constant 0 : index
      %c0_13 = arith.constant 0 : index
      %c0_14 = arith.constant 0 : index
      %11 = vector.load %arg4[%c0_12, %c0_13, %c0_14] : memref<2x3x16xf32, #tpu.memory_space<vmem>>, vector<2x3x16xf32>
      %cst_15 = arith.constant dense<0.000000e+00> : vector<2x3xf32>
      %12 = vector.multi_reduction <add>, %11, %cst_15 [2] : vector<2x3x16xf32> to vector<2x3xf32>
      %13 = vector.shape_cast %12 : vector<2x3xf32> to vector<2x3x1xf32>
      %cst_16 = arith.constant 3.906250e-03 : f32
      %14 = vector.broadcast %cst_16 : f32 to vector<2x3x1xf32>
      %15 = arith.mulf %13, %14 : vector<2x3x1xf32>
      %16 = vector.extract_strided_slice %15 {offsets = [0, 0, 0], sizes = [2, 1, 1], strides = [1, 1, 1]} : vector<2x3x1xf32> to vector<2x1x1xf32>
      %17 = vector.extract_strided_slice %15 {offsets = [0, 1, 0], sizes = [2, 1, 1], strides = [1, 1, 1]} : vector<2x3x1xf32> to vector<2x1x1xf32>
      %18 = vector.extract_strided_slice %15 {offsets = [0, 2, 0], sizes = [2, 1, 1], strides = [1, 1, 1]} : vector<2x3x1xf32> to vector<2x1x1xf32>
      %19 = arith.subf %16, %17 : vector<2x1x1xf32>
      %20 = arith.mulf %19, %19 : vector<2x1x1xf32>
      %21 = arith.subf %16, %18 : vector<2x1x1xf32>
      %22 = arith.mulf %21, %21 : vector<2x1x1xf32>
      %23 = arith.subf %18, %17 : vector<2x1x1xf32>
      %24 = arith.mulf %23, %23 : vector<2x1x1xf32>
      %25 = arith.mulf %20, %20 : vector<2x1x1xf32>
      %26 = arith.mulf %22, %22 : vector<2x1x1xf32>
      %27 = arith.addf %25, %26 : vector<2x1x1xf32>
      %28 = arith.mulf %24, %24 : vector<2x1x1xf32>
      %29 = arith.addf %27, %28 : vector<2x1x1xf32>
      %30 = math.sqrt %29 : vector<2x1x1xf32>
      %c0_17 = arith.constant 0 : index
      %c0_18 = arith.constant 0 : index
      %c0_19 = arith.constant 0 : index
      %31 = vector.load %arg3[%c0_17, %c0_18, %c0_19] : memref<2x1x1xf32, #tpu.memory_space<vmem>>, vector<2x1x1xf32>
      tpu.vector_store %arg3[%c0_17, %c0_18, %c0_19], %30 {strides = array<i32>} : memref<2x1x1xf32, #tpu.memory_space<vmem>>, vector<2x1x1xf32>,
    } else {
    }
    return
  }
  func.func @transform_0(%arg0: i32, %arg1: i32) -> (i32, i32, i32, i32) {
    %c0_i32 = arith.constant 0 : i32
    %c0_i32_0 = arith.constant 0 : i32
    %c0_i32_1 = arith.constant 0 : i32
    return %arg0, %c0_i32, %arg1, %c0_i32_0 : i32, i32, i32, i32
  }
  func.func @transform_1(%arg0: i32, %arg1: i32) -> (i32, i32, i32) {
    %c0_i32 = arith.constant 0 : i32
    %c0_i32_0 = arith.constant 0 : i32
    %c0_i32_1 = arith.constant 0 : i32
    return %arg0, %c0_i32, %c0_i32_0 : i32, i32, i32
  }
}

</mosaic_0001>

<llo_original>
// kernel: tpu_custom_call.1
$region0: #{tpu_custom_call.1}
  #allocation0 [shape = 'u32[]', space=smem, size = 0x4, offset = 0x4, fixed_abs, tag = 'smem constant byte address 0x4 - core index']
  #allocation1 [shape = 'u32[144,128]{1,0:T(1,128)}', space=vmem, size = 0x12000, scoped, tag = 'internal scratch']
  #allocation2 [shape = 'f32[2,3,16]{2,1,0:T(4,128)}', space=vmem, size = 0x1000, scoped, tag = 'scratch operand']
  %s0 = inlined_call_operand.hbm [shape: f32[2,3,16,16], index: 0, kind: input, shape index: {}]
  %s1 = inlined_call_operand.vmem [shape: f32[2,1,1], index: 1, kind: output, shape index: {}]
  %s2 = sld [smem:[#allocation0]]
  $region26: #{tpu_custom_call.1} parent=0
    _
  %s4 = ssub.s32 1, %s2
  %s5 = scalar_select 0, %s4, %s2
  $region1: #{tpu_custom_call.1} parent=0
    #allocation3 [shape = 'u8[49152]{0}', space=vmem, size = 0xc000, scoped, tag = 'input window, operand 0, single buffered']
    #allocation4 [shape = 's32[1]{0}', space=sflag, size = 0x4, scoped, tag = 'scoped memory for tpu_custom_call.1']
    %6 = vsyncpa [#allocation4], 0
    // Predicated region
    $region2: #{tpu_custom_call.1} parent=1 // pred_check
      _
    $region3: #{tpu_custom_call.1} parent=1 // pred_check_branch
      %8 = sbr.rel (0) target = $region5
    $region4: #{tpu_custom_call.1} parent=1 // pred_region
      %s10 = ssub.s32 1536, 1536
      %11 = vsyncadd [#allocation4], %s10
      %s12 = sshll.u32 [#allocation3], 4
      %s13 = int_to_ptr.vmem [resolvable:$true] %s12
      %18 = dma.hbm_to_vmem [thread:$0]  %s0, 1536, %s13, [#allocation4], 128, 128, 8
    $region5: #{tpu_custom_call.1} parent=1 // pred_fallthru
      _
    // Predicated region
    $region6: #{tpu_custom_call.1} parent=1 // pred_check
      _
    $region7: #{tpu_custom_call.1} parent=1 // pred_check_branch
      %20 = sbr.rel (0) target = $region9
    $region8: #{tpu_custom_call.1} parent=1 // pred_region
      %21 = dma.done [#allocation4], 1536
    $region9: #{tpu_custom_call.1} parent=1 // pred_fallthru
      _
    %p22 = scmp.eq.s32.totalorder 0, 0
    // Predicated region
    $region10: #{tpu_custom_call.1} parent=1 // pred_check
      %p23 = pneg %p22
    $region11: #{tpu_custom_call.1} parent=1 // pred_check_branch
      %25 = sbr.rel (%p23) target = $region13
    $region12: #{tpu_custom_call.1} parent=1 // pred_region
      %vm26 = vcmask 124928
      %27 = vst.msk [vmem:[#allocation2] sm:$0x7] %vm26, 0.0
      %28 = vst.msk [vmem:[#allocation2 + $0x4] sm:$0x7] %vm26, 0.0
    $region13: #{tpu_custom_call.1} parent=1 // pred_fallthru
      _
    %v29 = vld [vmem:[#allocation3] sm:$0xff]
    %v30 = vld [vmem:[#allocation3 + $0x8] sm:$0xff]
    %v31 = vld [vmem:[#allocation3 + $0x10] sm:$0xff]
    %v32 = vld [vmem:[#allocation3 + $0x18] sm:$0xff]
    %v33 = vld [vmem:[#allocation3 + $0x20] sm:$0xff]
    %v34 = vld [vmem:[#allocation3 + $0x28] sm:$0xff]
    %v35 = vld [vmem:[#allocation3 + $0x30] sm:$0xff]
    %v36 = vld [vmem:[#allocation3 + $0x38] sm:$0xff]
    %v37 = vld [vmem:[#allocation3 + $0x40] sm:$0xff]
    %v38 = vld [vmem:[#allocation3 + $0x48] sm:$0xff]
    %v39 = vld [vmem:[#allocation3 + $0x50] sm:$0xff]
    %v40 = vld [vmem:[#allocation3 + $0x58] sm:$0xff]
    %v41 = vld [vmem:[#allocation2] sm:$0x7]
    %v42 = vld [vmem:[#allocation2 + $0x4] sm:$0x7]
    %vm43 = vcmask 130048
    %v44 = vsel %vm43, %v29, 0.0
    %v45 = vsel %vm43, %v30, 0.0
    %v46 = vadd.f32 %v44, %v45
    %v47 = vrot.slane %v46, 4
    %v48 = vadd.f32 %v46, %v47
    %v49 = vrot.slane %v48, 2
    %v50 = vadd.f32 %v48, %v49
    %v51 = vrot.slane %v50, 1
    %v52 = vadd.f32 %v50, %v51
    %v53 = vsel %vm43, %v31, 0.0
    %v54 = vsel %vm43, %v32, 0.0
    %v55 = vadd.f32 %v53, %v54
    %v56 = vrot.slane %v55, 4
    %v57 = vadd.f32 %v55, %v56
    %v58 = vrot.slane %v57, 2
    %v59 = vadd.f32 %v57, %v58
    %v60 = vrot.slane %v59, 1
    %v61 = vadd.f32 %v59, %v60
    %v62 = vsel %vm43, %v33, 0.0
    %v63 = vsel %vm43, %v34, 0.0
    %v64 = vadd.f32 %v62, %v63
    %v65 = vrot.slane %v64, 4
    %v66 = vadd.f32 %v64, %v65
    %v67 = vrot.slane %v66, 2
    %v68 = vadd.f32 %v66, %v67
    %v69 = vrot.slane %v68, 1
    %v70 = vadd.f32 %v68, %v69
    %v71 = vsel %vm43, %v35, 0.0
    %v72 = vsel %vm43, %v36, 0.0
    %v73 = vadd.f32 %v71, %v72
    %v74 = vrot.slane %v73, 4
    %v75 = vadd.f32 %v73, %v74
    %v76 = vrot.slane %v75, 2
    %v77 = vadd.f32 %v75, %v76
    %v78 = vrot.slane %v77, 1
    %v79 = vadd.f32 %v77, %v78
    %v80 = vsel %vm43, %v37, 0.0
    %v81 = vsel %vm43, %v38, 0.0
    %v82 = vadd.f32 %v80, %v81
    %v83 = vrot.slane %v82, 4
    %v84 = vadd.f32 %v82, %v83
    %v85 = vrot.slane %v84, 2
    %v86 = vadd.f32 %v84, %v85
    %v87 = vrot.slane %v86, 1
    %v88 = vadd.f32 %v86, %v87
    %v89 = vsel %vm43, %v39, 0.0
    %v90 = vsel %vm43, %v40, 0.0
    %v91 = vadd.f32 %v89, %v90
    %v92 = vrot.slane %v91, 4
    %v93 = vadd.f32 %v91, %v92
    %v94 = vrot.slane %v93, 2
    %v95 = vadd.f32 %v93, %v94
    %v96 = vrot.slane %v95, 1
    %v97 = vadd.f32 %v95, %v96
    %vm104 = vcmask 1041409
    %v105 = vsel %vm104, %v61, %v52
    %vm106 = vcmask 1042434
    %v107 = vsel %vm106, %v70, %v105
    %v108 = vsel %vm104, %v88, %v79
    %v109 = vsel %vm106, %v97, %v108
    %v112 = vadd.f32 %v41, %v107
    %v113 = vadd.f32 %v42, %v109
    %vm114 = vcmask 124928
    %115 = vst.msk [vmem:[#allocation2] sm:$0x7] %vm114, %v112
    %116 = vst.msk [vmem:[#allocation2 + $0x4] sm:$0x7] %vm114, %v113
    // Predicated region
    $region14: #{tpu_custom_call.1} parent=1 // pred_check
      %p117 = pneg %p22
    $region15: #{tpu_custom_call.1} parent=1 // pred_check_branch
      %119 = sbr.rel (%p117) target = $region17
    $region16: #{tpu_custom_call.1} parent=1 // pred_region
      %v120 = vld [vmem:[#allocation2] sm:$0x7]
      %v121 = vld [vmem:[#allocation2 + $0x4] sm:$0x7]
      %v122 = vsel %vm114, %v120, 0.0
      %123 = vadd.xlane.f32.xlu0 %v122
      %v124 = vpop.xlane.xlu0 %123
      %v125 = vsel %vm114, %v121, 0.0
      %126 = vadd.xlane.f32.xlu0 %v125
      %v127 = vpop.xlane.xlu0 %126
      %v128 = vmul.f32 %v124, 0.00390625
      %v129 = vmul.f32 %v127, 0.00390625
      %v132 = vrot.slane %v128, 1
      %v133 = vrot.slane %v129, 1
      %v136 = vsub.f32 %v128, %v132
      %v137 = vsub.f32 %v129, %v133
      %v138 = vmul.f32 %v136, %v136
      %v139 = vmul.f32 %v137, %v137
      %v140 = vrot.slane %v128, 2
      %v141 = vrot.slane %v129, 2
      %v144 = vsub.f32 %v128, %v140
      %v145 = vsub.f32 %v129, %v141
      %v146 = vmul.f32 %v144, %v144
      %v147 = vmul.f32 %v145, %v145
      %v148 = vrot.slane %v128, 7
      %v149 = vrot.slane %v129, 7
      %v152 = vsub.f32 %v128, %v148
      %v153 = vsub.f32 %v129, %v149
      %v154 = vmul.f32 %v152, %v152
      %v155 = vmul.f32 %v153, %v153
      %v156 = vmul.f32 %v138, %v138
      %v157 = vmul.f32 %v139, %v139
      %v158 = vmul.f32 %v146, %v146
      %v159 = vmul.f32 %v147, %v147
      %v160 = vadd.f32 %v156, %v158
      %v161 = vadd.f32 %v157, %v159
      %v162 = vmul.f32 %v154, %v154
      %v163 = vmul.f32 %v155, %v155
      %v166 = vrot.slane %v162, 2
      %v167 = vrot.slane %v163, 2
      %v170 = vadd.f32 %v160, %v166
      %v171 = vadd.f32 %v161, %v167
      %v172 = vrsqrt.pop %v170
      %v173 = vmul.f32 %v170, %v172
      %vm174 = vcmp.eq.f32.partialorder %v170, inf
      %v175 = vsel %vm174, %v170, %v173
      %vm176 = vcmp.eq.f32.partialorder %v170, 0.0
      %v177 = vand.u32 %v170, 2147483648
      %v178 = vsel %vm176, %v177, %v175
      %v179 = vrsqrt.pop %v171
      %v180 = vmul.f32 %v171, %v179
      %vm181 = vcmp.eq.f32.partialorder %v171, inf
      %v182 = vsel %vm181, %v171, %v180
      %vm183 = vcmp.eq.f32.partialorder %v171, 0.0
      %v184 = vand.u32 %v171, 2147483648
      %v185 = vsel %vm183, %v184, %v182
      %vm186 = vcmask 0
      %187 = vst.msk [vmem:[%s1] sm:$0x1] %vm186, %v178
      %188 = vst.msk [vmem:[%s1 + $0x1] sm:$0x1] %vm186, %v185
    $region17: #{tpu_custom_call.1} parent=1 // pred_fallthru
      _
    // Predicated region
    $region18: #{tpu_custom_call.1} parent=1 // pred_check
      _
    $region19: #{tpu_custom_call.1} parent=1 // pred_check_branch
      %190 = sbr.rel (0) target = $region21
    $region20: #{tpu_custom_call.1} parent=1 // pred_region
      _
    $region21: #{tpu_custom_call.1} parent=1 // pred_fallthru
      _
    // Predicated region
    $region22: #{tpu_custom_call.1} parent=1 // pred_check
      _
    $region23: #{tpu_custom_call.1} parent=1 // pred_check_branch
      %192 = sbr.rel (0) target = $region25
    $region24: #{tpu_custom_call.1} parent=1 // pred_region
      _
    $region25: #{tpu_custom_call.1} parent=1 // pred_fallthru
      _
    %193 = vsyncpa [#allocation4], 1

</llo_original>
